<compile_context>
chip_gen: v7x
topology: tpu7x:2x2x1
jax: 0.10.0
libtpu: 0.0.40
codegen_flags: <defaults>
</compile_context>

<pallas_src>
import jax
import jax.numpy as jnp
from jax.experimental import pallas as pl
from jax.experimental.pallas import tpu as pltpu


ACTIVATIONS = {
    "relu": lambda x: jnp.maximum(x, 0.0),
    "sin": jnp.sin,
    "tanh": jnp.tanh,
    None: lambda x: x,  # nn.Identity
}


def _vmem_sizing():
    """Per-generation VMEM budget (tile sizing) and scoped-VMEM limit."""
    try:
        phys = int(pltpu.get_tpu_info().vmem_capacity_bytes)
    except Exception:
        phys = 64 * 1024 * 1024  # conservative (v7x-safe) fallback
    vmem_limit = min(phys // 2, 64 * 1024 * 1024)   # 64 MiB on v5e/v6e, 32 MiB on v7x
    budget = (vmem_limit * 3) // 4                   # 48 MiB / 24 MiB
    return budget, vmem_limit


def _round_up(v, m):
    return ((v + m - 1) // m) * m


def single_layer_forward(x, weight, bias, *, activation, tile_m=8192):
    """Forward pass of SingleLayer.

    x:      (N, in_features)            float32
    weight: (out_features, in_features) float32 (PyTorch nn.Linear layout)
    bias:   (out_features,) or None
    """
    if activation not in ACTIVATIONS:
        raise ValueError(f"Activation '{activation}' is not supported.")
    act_fn = ACTIVATIONS[activation]

    n, in_f = x.shape
    out_f = weight.shape[0]
    omega = 30.0 if activation == "sin" else 1.0
    out_dtype = x.dtype

    # Fold omega into the parameters (touches only in_f*out_f (+out_f) values
    # once, host side) so the in-kernel epilogue has no extra VPU multiply.
    wt = weight.T.astype(jnp.float32) * omega                    # (in_f, out_f)
    b = None if bias is None else bias.astype(jnp.float32) * omega

    # ---- Lane-dense packing -------------------------------------------------
    # Pad out_f up to the next divisor of 128 (powers of two), then pack
    # r = 128 // out_f_pad consecutive rows into one 128-lane output row via a
    # block-diagonal weight.  Row-major (N, out_f_pad) and (N/r, r*out_f_pad)
    # share the same memory layout, so pack/unpack reshapes are free; stores
    # and the epilogue then use all 128 lanes.  Only enabled when N % r == 0
    # (no jnp.pad / slice full-array copies).  Extra MACs on the zero blocks
    # are free on a <1%-utilized MXU.
    out_f_pad, r = out_f, 1
    if out_f < 128:
        p = 1
        while p < out_f:
            p *= 2                       # next power of two >= out_f (divides 128)
        cand_pad, cand_r = p, 128 // p
        if n % cand_r == 0:
            out_f_pad, r = cand_pad, cand_r
    # TODO(synk): out_f > 128 and not a multiple of 128 still uses masked
    # partial stores; padding to the next multiple of 128 would trade an
    # output-slice copy for dense stores.

    if out_f_pad != out_f:
        wt = jnp.pad(wt, ((0, 0), (0, out_f_pad - out_f)))
        if b is not None:
            b = jnp.pad(b, (0, out_f_pad - out_f))

    if r > 1:
        # Free reshape (same row-major layout) + block-diagonal weight so the
        # matmul natively produces the packed, lane-dense output.
        x2 = x.reshape(n // r, r * in_f)
        wt2 = jnp.kron(jnp.eye(r, dtype=jnp.float32), wt)        # (r*in_f, r*out_f_pad)
        b2 = None if b is None else jnp.tile(b, r)
    else:
        x2, wt2, b2 = x, wt, b

    m, k = x2.shape
    f = wt2.shape[1]

    # ---- Row-tile sizing ----------------------------------------------------
    # Double-buffered x and out tiles, double-buffered resident weight/bias,
    # plus ~one f32 tile of headroom for the pre-activation intermediate.
    budget, vmem_limit = _vmem_sizing()
    fixed_bytes = (k * f + f) * 4 * 2
    bytes_per_row = (2 * k + 3 * f) * 4
    if fixed_bytes + 8 * bytes_per_row > budget:
        # No K/F tiling path in this kernel; fail loudly instead of silently
        # degrading to an 8-row tile that still wouldn't fit.
        raise ValueError(
            f"SingleLayer weight ({k}x{f} f32) does not fit the VMEM budget "
            f"({budget} bytes); a K/F-tiled kernel would be required.")
    cap = max(8, ((budget - fixed_bytes) // bytes_per_row) // 8 * 8)
    tile_m = min(tile_m, cap)
    tile_m = max(8, (tile_m // 8) * 8)

    if m <= tile_m:
        if m >= 32:
            # Guarantee >= 2 grid steps: both v7x TensorCores get work and
            # DMA/compute overlap exists; costs one extra ~0.35 us step.
            tile_m = _round_up((m + 1) // 2, 8)
        else:
            tile_m = m                   # tiny: single block == full dim (legal)
    grid = (pl.cdiv(m, tile_m),)
    # Partial last block: Pallas masks the output stores; act_fn does run on
    # the garbage padding rows of x, which is safe (TPU FP doesn't trap and
    # nothing accumulates into those rows).

    if b2 is not None:
        b2 = b2.reshape(1, f)

        def kernel(x_ref, wt_ref, b_ref, o_ref):
            y = jnp.dot(x_ref[...], wt_ref[...],
                        preferred_element_type=jnp.float32)
            y = y + b_ref[...]
            o_ref[...] = act_fn(y).astype(o_ref.dtype)

        in_specs = [
            pl.BlockSpec((tile_m, k), lambda i: (i, 0)),
            pl.BlockSpec((k, f), lambda i: (0, 0)),
            pl.BlockSpec((1, f), lambda i: (0, 0)),
        ]
        args = (x2, wt2, b2)
    else:
        # No bias: skip the pointless zero-bias DMA / buffer entirely.
        def kernel(x_ref, wt_ref, o_ref):
            y = jnp.dot(x_ref[...], wt_ref[...],
                        preferred_element_type=jnp.float32)
            o_ref[...] = act_fn(y).astype(o_ref.dtype)

        in_specs = [
            pl.BlockSpec((tile_m, k), lambda i: (i, 0)),
            pl.BlockSpec((k, f), lambda i: (0, 0)),
        ]
        args = (x2, wt2)

    cost = pl.CostEstimate(
        flops=2 * m * k * f,
        transcendentals=(m * f) if activation in ("sin", "tanh") else 0,
        bytes_accessed=(m * k + k * f + m * f + f) * 4,
    )

    out2 = pl.pallas_call(
        kernel,
        out_shape=jax.ShapeDtypeStruct((m, f), out_dtype),
        grid_spec=pltpu.PrefetchScalarGridSpec(
            num_scalar_prefetch=0,
            grid=grid,
            in_specs=in_specs,
            out_specs=pl.BlockSpec((tile_m, f), lambda i: (i, 0)),
        ),
        compiler_params=pltpu.CompilerParams(
            dimension_semantics=("parallel",),   # rows independent -> megacore/2-TC
            vmem_limit_bytes=vmem_limit,
        ),
        cost_estimate=cost,
    )(*args)

    # Unpack (free, same row-major layout); drop any padded output columns.
    out = out2.reshape(n, out_f_pad)
    if out_f_pad != out_f:
        out = out[:, :out_f]
    return out


if __name__ == "__main__":
    # Small shapes consistent with the module's forward:
    # a batch of N coordinates, in_features=32, out_features=32.
    N, IN_F, OUT_F = 256, 32, 32
    activation = "sin"
    is_first = True

    key = jax.random.PRNGKey(0)
    kx, kw, kb = jax.random.split(key, 3)

    x = jax.random.normal(kx, (N, IN_F), dtype=jnp.float32)

    # Deterministic parameter init mirroring the PyTorch module.
    if is_first:
        w_bound = 1.0 / IN_F
    else:
        omega0 = 30.0 if activation == "sin" else 1.0
        w_bound = float(jnp.sqrt(6.0 / IN_F)) / omega0
    weight = jax.random.uniform(
        kw, (OUT_F, IN_F), minval=-w_bound, maxval=w_bound, dtype=jnp.float32
    )
    b_bound = 1.0 / (IN_F ** 0.5)  # default nn.Linear bias init
    bias = jax.random.uniform(
        kb, (OUT_F,), minval=-b_bound, maxval=b_bound, dtype=jnp.float32
    )

    # 1) sin path with bias (omega = 30).
    out = single_layer_forward(x, weight, bias, activation=activation)
    out = jax.block_until_ready(out)
    omega = 30.0 if activation == "sin" else 1.0
    ref = jnp.sin((x @ weight.T + bias) * omega)
    assert out.shape == (N, OUT_F)
    assert jnp.allclose(out, ref, atol=3e-5, rtol=1e-5), "mismatch vs reference"

    # 2) bias=None / Identity-activation path.
    out2 = single_layer_forward(x, weight, None, activation=None)
    out2 = jax.block_until_ready(out2)
    ref2 = x @ weight.T
    assert jnp.allclose(out2, ref2, atol=3e-5, rtol=1e-5), "mismatch (no bias)"

    # 3) out_features that does not divide 128 (exercises column-pad packing).
    OUT_F3 = 48
    w3 = jax.random.uniform(kw, (OUT_F3, IN_F), minval=-w_bound, maxval=w_bound,
                            dtype=jnp.float32)
    b3 = jax.random.uniform(kb, (OUT_F3,), minval=-b_bound, maxval=b_bound,
                            dtype=jnp.float32)
    out3 = jax.block_until_ready(
        single_layer_forward(x, w3, b3, activation="relu"))
    ref3 = jnp.maximum(x @ w3.T + b3, 0.0)
    assert out3.shape == (N, OUT_F3)
    assert jnp.allclose(out3, ref3, atol=3e-5, rtol=1e-5), "mismatch (out_f=48)"

    # 4) N not divisible by the packing factor (exercises the r=1 fallback).
    x4 = x[:250]
    out4 = jax.block_until_ready(
        single_layer_forward(x4, weight, bias, activation="tanh"))
    ref4 = jnp.tanh(x4 @ weight.T + bias)
    assert out4.shape == (250, OUT_F)
    assert jnp.allclose(out4, ref4, atol=3e-5, rtol=1e-5), "mismatch (N=250)"

    print("KERNEL_OK")
</pallas_src>

<mosaic_0001>
module attributes {stable_mosaic.version = 11 : i64} {
  func.func @kernel(%arg0: i32, %arg1: memref<32x128xf32, #tpu.memory_space<vmem>>, %arg2: memref<128x128xf32, #tpu.memory_space<vmem>>, %arg3: memref<1x128xf32, #tpu.memory_space<vmem>>, %arg4: memref<32x128xf32, #tpu.memory_space<vmem>>) attributes {dimension_semantics = [#tpu.dimension_semantics<parallel>], iteration_bounds = array<i64: 2>, scalar_prefetch = 0 : i64, scratch_operands = 0 : i64, tpu.core_type = #tpu.core_type<tc>, window_params = [{transform_indices = @transform_0, window_bounds = array<i64: 32, 128>}, {pipeline_mode = #tpu.pipeline_mode<synchronous>, transform_indices = @transform_1, window_bounds = array<i64: 128, 128>}, {pipeline_mode = #tpu.pipeline_mode<synchronous>, transform_indices = @transform_2, window_bounds = array<i64: 1, 128>}, {transform_indices = @transform_3, window_bounds = array<i64: 32, 128>}]} {
    %c0 = arith.constant 0 : index
    %c0_0 = arith.constant 0 : index
    %0 = vector.load %arg1[%c0, %c0_0] : memref<32x128xf32, #tpu.memory_space<vmem>>, vector<32x128xf32>
    %c0_1 = arith.constant 0 : index
    %c0_2 = arith.constant 0 : index
    %1 = vector.load %arg2[%c0_1, %c0_2] : memref<128x128xf32, #tpu.memory_space<vmem>>, vector<128x128xf32>
    %cst = arith.constant dense<0.000000e+00> : vector<32x128xf32>
    %2 = tpu.matmul %0, %1, %cst {dimension_numbers = #tpu.dot_dimension_numbers<[1], [0], [0], [1], [0, 0, 1, 1], [], []>} : vector<32x128xf32>, vector<128x128xf32>, vector<32x128xf32> -> vector<32x128xf32>
    %c0_3 = arith.constant 0 : index
    %c0_4 = arith.constant 0 : index
    %3 = vector.load %arg3[%c0_3, %c0_4] : memref<1x128xf32, #tpu.memory_space<vmem>>, vector<1x128xf32>
    %4 = vector.broadcast %3 : vector<1x128xf32> to vector<32x128xf32>
    %5 = arith.addf %2, %4 : vector<32x128xf32>
    %6 = math.sin %5 : vector<32x128xf32>
    %c0_5 = arith.constant 0 : index
    %c0_6 = arith.constant 0 : index
    %7 = vector.load %arg4[%c0_5, %c0_6] : memref<32x128xf32, #tpu.memory_space<vmem>>, vector<32x128xf32>
    tpu.vector_store %arg4[%c0_5, %c0_6], %6 {strides = array<i32>} : memref<32x128xf32, #tpu.memory_space<vmem>>, vector<32x128xf32>,
    return
  }
  func.func @transform_0(%arg0: i32) -> (i32, i32) {
    %c0_i32 = arith.constant 0 : i32
    %c0_i32_0 = arith.constant 0 : i32
    return %arg0, %c0_i32 : i32, i32
  }
  func.func @transform_1(%arg0: i32) -> (i32, i32) {
    %c0_i32 = arith.constant 0 : i32
    %c0_i32_0 = arith.constant 0 : i32
    %c0_i32_1 = arith.constant 0 : i32
    return %c0_i32, %c0_i32_0 : i32, i32
  }
  func.func @transform_2(%arg0: i32) -> (i32, i32) {
    %c0_i32 = arith.constant 0 : i32
    %c0_i32_0 = arith.constant 0 : i32
    %c0_i32_1 = arith.constant 0 : i32
    return %c0_i32, %c0_i32_0 : i32, i32
  }
  func.func @transform_3(%arg0: i32) -> (i32, i32) {
    %c0_i32 = arith.constant 0 : i32
    %c0_i32_0 = arith.constant 0 : i32
    return %arg0, %c0_i32 : i32, i32
  }
}

</mosaic_0001>

<llo_original>
// kernel: tpu_custom_call.1
$region0: #{tpu_custom_call.1}
  #allocation0 [shape = 'u32[]', space=smem, size = 0x4, offset = 0x4, fixed_abs, tag = 'smem constant byte address 0x4 - core index']
  #allocation1 [shape = 'u32[144,128]{1,0:T(1,128)}', space=vmem, size = 0x12000, scoped, tag = 'internal scratch']
  %s0 = inlined_call_operand.hbm [shape: f32[64,128], index: 0, kind: input, shape index: {}]
  %s1 = inlined_call_operand.hbm [shape: f32[128,128], index: 1, kind: input, shape index: {}]
  %s2 = inlined_call_operand.vmem [shape: f32[1,128], index: 2, kind: input, shape index: {}]
  %s3 = inlined_call_operand.hbm [shape: f32[64,128], index: 3, kind: output, shape index: {}]
  %s4 = sld [smem:[#allocation0]]
  $region53: #{tpu_custom_call.1} parent=0
    _
  %s6 = ssub.s32 1, %s4
  %s7 = scalar_select 0, %s6, %s4
  $region1: #{tpu_custom_call.1} parent=0
    #allocation2 [shape = 'u8[32768]{0}', space=vmem, size = 0x8000, scoped, tag = 'input window, operand 0']
    #allocation3 [shape = 's32[2]{0}', space=sflag, size = 0x8, scoped, tag = 'scoped memory for tpu_custom_call.1']
    #allocation4 [shape = 's32[2]{0}', space=sflag, size = 0x8, scoped, tag = 'scoped memory for tpu_custom_call.1']
    #allocation5 [shape = 'u8[65536]{0}', space=vmem, size = 0x10000, scoped, tag = 'input window, operand 1, single buffered']
    #allocation6 [shape = 's32[1]{0}', space=sflag, size = 0x4, scoped, tag = 'scoped memory for tpu_custom_call.1']
    #allocation7 [shape = 'u8[32768]{0}', space=vmem, size = 0x8000, scoped, tag = 'output window, operand 0']
    %8 = vsyncpa [#allocation3], 0
    %s9 = scalar_lea.sflag [#allocation3], 1
    %10 = vsyncpa %s9, 0
    %11 = vsyncpa [#allocation6], 0
    %12 = vsyncpa [#allocation4], 0
    %s13 = scalar_lea.sflag [#allocation4], 1
    %14 = vsyncpa %s13, 0
    loop: start=0, step=1, limit=4
    $region2: #{tpu_custom_call.1} parent=1 // loop_pre_header
      _
    $region3: #{tpu_custom_call.1} parent=1 // loop_header
      %s16 = sphi 0, %s20
      %p17 = scmp.ge.s32.totalorder %s16, 4
      %s26 = sphi 0, %s28
      %s29 = sphi 0, %s26
      %s30 = sphi 0, %s29
      %s46 = sphi 0, %s30
      %s50 = sphi 0, %s50
      %s52 = sphi 0, %s50
      %s53 = sphi 0, %s52
      %s67 = sphi 0, %s53
      %s71 = sphi 0, %s71
      %s73 = sphi 0, %s71
      %s74 = sphi 0, %s73
      %s88 = sphi 0, %s74
      %s94 = sphi 0, %s96
      %s97 = sphi 0, %s94
      %s98 = sphi 0, %s97
      %s114 = sphi 0, %s98
    $region4: #{tpu_custom_call.1} parent=1 // loop_header_branch
      %19 = sbr.rel (%p17) target = $region8
    $region5: #{tpu_custom_call.1} parent=1 // loop_body
      %s21 = ssub.s32 %s16, 1
      %s22 = ssub.s32 %s16, 2
      %s23 = sadd.s32 %s16, 1
      %s24 = ssub.s32 %s16, %s23
      %p25 = scmp.eq.s32.totalorder %s24, 0
      %s27 = sadd.s32 %s26, 1
      %s28 = scalar_select %p25, %s26, %s27
      %p31 = pneg %p25
      %p32 = scmp.eq.s32.totalorder %s16, 1
      %p33 = por %p31, %p32
      %p34 = scmp.ne.s32.totalorder %s26, %s29
      %p35 = scmp.eq.s32.totalorder %s16, 0
      %p36 = por %p34, %p35
      %p37 = scmp.ne.s32.totalorder %s26, %s29
      %p38 = scmp.eq.s32.totalorder %s21, 1
      %p39 = por %p37, %p38
      %p40 = scmp.ne.s32.totalorder %s29, %s30
      %p41 = scmp.eq.s32.totalorder %s21, 0
      %p42 = por %p40, %p41
      %p43 = scmp.ne.s32.totalorder %s29, %s30
      %p44 = scmp.eq.s32.totalorder %s22, 1
      %p45 = por %p43, %p44
      %p47 = scmp.ne.s32.totalorder %s30, %s46
      %p48 = scmp.eq.s32.totalorder %s22, 0
      %p49 = por %p47, %p48
      %s51 = sadd.s32 %s50, 1
      %p54 = scmp.eq.s32.totalorder %s16, 1
      %p55 = scmp.ne.s32.totalorder %s50, %s52
      %p56 = scmp.eq.s32.totalorder %s16, 0
      %p57 = por %p55, %p56
      %p58 = scmp.ne.s32.totalorder %s50, %s52
      %p59 = scmp.eq.s32.totalorder %s21, 1
      %p60 = por %p58, %p59
      %p61 = scmp.ne.s32.totalorder %s52, %s53
      %p62 = scmp.eq.s32.totalorder %s21, 0
      %p63 = por %p61, %p62
      %p64 = scmp.ne.s32.totalorder %s52, %s53
      %p65 = scmp.eq.s32.totalorder %s22, 1
      %p66 = por %p64, %p65
      %p68 = scmp.ne.s32.totalorder %s53, %s67
      %p69 = scmp.eq.s32.totalorder %s22, 0
      %p70 = por %p68, %p69
      %s72 = sadd.s32 %s71, 1
      %p75 = scmp.eq.s32.totalorder %s16, 1
      %p76 = scmp.ne.s32.totalorder %s71, %s73
      %p77 = scmp.eq.s32.totalorder %s16, 0
      %p78 = por %p76, %p77
      %p79 = scmp.ne.s32.totalorder %s71, %s73
      %p80 = scmp.eq.s32.totalorder %s21, 1
      %p81 = por %p79, %p80
      %p82 = scmp.ne.s32.totalorder %s73, %s74
      %p83 = scmp.eq.s32.totalorder %s21, 0
      %p84 = por %p82, %p83
      %p85 = scmp.ne.s32.totalorder %s73, %s74
      %p86 = scmp.eq.s32.totalorder %s22, 1
      %p87 = por %p85, %p86
      %p89 = scmp.ne.s32.totalorder %s74, %s88
      %p90 = scmp.eq.s32.totalorder %s22, 0
      %p91 = por %p89, %p90
      %s92 = ssub.s32 %s16, %s23
      %p93 = scmp.eq.s32.totalorder %s92, 0
      %s95 = sadd.s32 %s94, 1
      %s96 = scalar_select %p93, %s94, %s95
      %p99 = pneg %p93
      %p100 = scmp.eq.s32.totalorder %s16, 1
      %p101 = por %p99, %p100
      %p102 = scmp.ne.s32.totalorder %s94, %s97
      %p103 = scmp.eq.s32.totalorder %s16, 0
      %p104 = por %p102, %p103
      %p105 = scmp.ne.s32.totalorder %s94, %s97
      %p106 = scmp.eq.s32.totalorder %s21, 1
      %p107 = por %p105, %p106
      %p108 = scmp.ne.s32.totalorder %s97, %s98
      %p109 = scmp.eq.s32.totalorder %s21, 0
      %p110 = por %p108, %p109
      %p111 = scmp.ne.s32.totalorder %s97, %s98
      %p112 = scmp.eq.s32.totalorder %s22, 1
      %p113 = por %p111, %p112
      %p115 = scmp.ne.s32.totalorder %s98, %s114
      %p116 = scmp.eq.s32.totalorder %s22, 0
      %p117 = por %p115, %p116
      %p118 = scmp.le.s32.totalorder 1, %s16
      %p119 = scmp.lt.s32.totalorder %s16, 3
      %p120 = pnand %p118, %p119
      %p121 = pneg %p120
      // Predicated region
      $region9: #{tpu_custom_call.1} parent=5 // pred_check
        _
      $region10: #{tpu_custom_call.1} parent=5 // pred_check_branch
        %123 = sbr.rel (%p120) target = $region12
      $region11: #{tpu_custom_call.1} parent=5 // pred_region
        %s124 = ssub.s32 %s16, 1
        // Predicated region
        $region13: #{tpu_custom_call.1} parent=11 // pred_check
          %p125 = pneg %p63
        $region14: #{tpu_custom_call.1} parent=11 // pred_check_branch
          %127 = sbr.rel (%p125) target = $region16
        $region15: #{tpu_custom_call.1} parent=11 // pred_region
          %s129 = ssub.s32 2048, 2048
          %130 = vsyncadd [#allocation6], %s129
          %s131 = sshll.u32 [#allocation5], 4
          %s132 = int_to_ptr.vmem [resolvable:$true] %s131
          %137 = dma.hbm_to_vmem [thread:$0]  %s1, 2048, %s132, [#allocation6], 128, 128, 8
        $region16: #{tpu_custom_call.1} parent=11 // pred_fallthru
          _
        // Predicated region
        $region17: #{tpu_custom_call.1} parent=11 // pred_check
          %p138 = pneg %p84
        $region18: #{tpu_custom_call.1} parent=11 // pred_check_branch
          %140 = sbr.rel (%p138) target = $region20
        $region19: #{tpu_custom_call.1} parent=11 // pred_region
          _
        $region20: #{tpu_custom_call.1} parent=11 // pred_fallthru
          _
      $region12: #{tpu_custom_call.1} parent=5 // pred_fallthru
        _
      %p141 = scmp.lt.s32.totalorder %s16, 2
      // Predicated region
      $region21: #{tpu_custom_call.1} parent=5 // pred_check
        %p142 = pneg %p141
      $region22: #{tpu_custom_call.1} parent=5 // pred_check_branch
        %144 = sbr.rel (%p142) target = $region24
      $region23: #{tpu_custom_call.1} parent=5 // pred_region
        // Predicated region
        $region25: #{tpu_custom_call.1} parent=23 // pred_check
          %p145 = pneg %p36
        $region26: #{tpu_custom_call.1} parent=23 // pred_check_branch
          %147 = sbr.rel (%p145) target = $region28
        $region27: #{tpu_custom_call.1} parent=23 // pred_region
          %s148 = sand.u32 %s26, 1
          %s149 = scalar_lea.sflag [#allocation3], %s148
          %s150 = sand.u32 %s26, 1
          %s151 = smul.addr %s150, 32
          %s152 = scalar_lea.vmem [#allocation2], %s151
          %s153 = smul.u32 4, %s16
          %s155 = ssub.s32 512, 512
          %156 = vsyncadd %s149, %s155
          %s157 = smul.addr %s153, 128
          %s158 = scalar_lea.hbm %s0, %s157
          %s159 = sshll.u32 %s152, 4
          %s160 = int_to_ptr.vmem [resolvable:$true] %s159
          %165 = dma.hbm_to_vmem [thread:$0]  %s158, 512, %s160, %s149, 128, 128, 8
        $region28: #{tpu_custom_call.1} parent=23 // pred_fallthru
          _
      $region24: #{tpu_custom_call.1} parent=5 // pred_fallthru
        _
      %p166 = scmp.le.s32.totalorder 1, %s16
      %p167 = scmp.lt.s32.totalorder %s16, 3
      %p168 = pnand %p166, %p167
      %p169 = pneg %p168
      // Predicated region
      $region29: #{tpu_custom_call.1} parent=5 // pred_check
        _
      $region30: #{tpu_custom_call.1} parent=5 // pred_check_branch
        %171 = sbr.rel (%p168) target = $region32
      $region31: #{tpu_custom_call.1} parent=5 // pred_region
        %s172 = ssub.s32 %s16, 1
        %s173 = sand.u32 %s29, 1
        %s174 = scalar_lea.sflag [#allocation3], %s173
        %s175 = sand.u32 %s29, 1
        %s176 = smul.addr %s175, 32
        %s177 = scalar_lea.vmem [#allocation2], %s176
        // Predicated region
        $region33: #{tpu_custom_call.1} parent=31 // pred_check
          %p178 = pneg %p42
        $region34: #{tpu_custom_call.1} parent=31 // pred_check_branch
          %180 = sbr.rel (%p178) target = $region36
        $region35: #{tpu_custom_call.1} parent=31 // pred_region
          %181 = dma.done %s174, 512
        $region36: #{tpu_custom_call.1} parent=31 // pred_fallthru
          _
        // Predicated region
        $region37: #{tpu_custom_call.1} parent=31 // pred_check
          %p182 = pneg %p63
        $region38: #{tpu_custom_call.1} parent=31 // pred_check_branch
          %184 = sbr.rel (%p182) target = $region40
        $region39: #{tpu_custom_call.1} parent=31 // pred_region
          %185 = dma.done [#allocation6], 2048
        $region40: #{tpu_custom_call.1} parent=31 // pred_fallthru
          _
        %s186 = sand.u32 %s29, 1
        %s187 = scalar_lea.sflag [#allocation3], %s186
        %s188 = sand.u32 %s29, 1
        %s189 = smul.addr %s188, 32
        %s190 = scalar_lea.vmem [#allocation2], %s189
        %p191 = pneg %p42
        %p192 = pneg %p39
        %p193 = pneg %p63
        %p194 = pneg %p60
        %p195 = pneg %p84
        %p196 = pneg %p81
        %p197 = pneg %p110
        %p198 = pneg %p107
        %s199 = sand.u32 %s97, 1
        %s200 = scalar_lea.sflag [#allocation4], %s199
        %s201 = sand.u32 %s97, 1
        %s202 = smul.addr %s201, 32
        %s203 = scalar_lea.vmem [#allocation7], %s202
        %s204 = smul.u32 4, %s21
        %s205 = smul.u32 4, %s21
        %v206 = vld [vmem:[%s177] sm:$0xff]
        %v207 = vld [vmem:[%s177 + $0x8] sm:$0xff]
        %v208 = vld [vmem:[%s177 + $0x10] sm:$0xff]
        %v209 = vld [vmem:[%s177 + $0x18] sm:$0xff]
        %v210 = vld [vmem:[#allocation5] sm:$0xff]
        %v211 = vld [vmem:[#allocation5 + $0x8] sm:$0xff]
        %v212 = vld [vmem:[#allocation5 + $0x10] sm:$0xff]
        %v213 = vld [vmem:[#allocation5 + $0x18] sm:$0xff]
        %v214 = vld [vmem:[#allocation5 + $0x20] sm:$0xff]
        %v215 = vld [vmem:[#allocation5 + $0x28] sm:$0xff]
        %v216 = vld [vmem:[#allocation5 + $0x30] sm:$0xff]
        %v217 = vld [vmem:[#allocation5 + $0x38] sm:$0xff]
        %v218 = vld [vmem:[#allocation5 + $0x40] sm:$0xff]
        %v219 = vld [vmem:[#allocation5 + $0x48] sm:$0xff]
        %v220 = vld [vmem:[#allocation5 + $0x50] sm:$0xff]
        %v221 = vld [vmem:[#allocation5 + $0x58] sm:$0xff]
        %v222 = vld [vmem:[#allocation5 + $0x60] sm:$0xff]
        %v223 = vld [vmem:[#allocation5 + $0x68] sm:$0xff]
        %v224 = vld [vmem:[#allocation5 + $0x70] sm:$0xff]
        %v225 = vld [vmem:[#allocation5 + $0x78] sm:$0xff]
        %v226 = vld [vmem:[%s2] sm:$0x1]
        %v228 = vlaneseq
        %v229 = vshrl.u32 %v228, 7
        %v230 = vsub.s32 0, %v229
        %v231 = vrot.slane %v226, %v230
        %233 = vmatprep.subr.mxu0 0.0
        %234 = vmatpush1.msra.mxu0 %v210
        %235 = vmatprep.subr.mxu0 0.0
        %236 = vmatpush1.msra.mxu0 %v211
        %237 = vmatprep.subr.mxu0 0.0
        %238 = vmatpush1.msra.mxu0 %v212
        %239 = vmatprep.subr.mxu0 0.0
        %240 = vmatpush1.msra.mxu0 %v213
        %241 = vmatprep.subr.mxu0 0.0
        %242 = vmatpush1.msra.mxu0 %v214
        %243 = vmatprep.subr.mxu0 0.0
        %244 = vmatpush1.msra.mxu0 %v215
        %245 = vmatprep.subr.mxu0 0.0
        %246 = vmatpush1.msra.mxu0 %v216
        %247 = vmatprep.subr.mxu0 0.0
        %248 = vmatpush1.msra.mxu0 %v217
        %249 = vmatprep.subr.mxu0 0.0
        %250 = vmatpush1.msra.mxu0 %v218
        %251 = vmatprep.subr.mxu0 0.0
        %252 = vmatpush1.msra.mxu0 %v219
        %253 = vmatprep.subr.mxu0 0.0
        %254 = vmatpush1.msra.mxu0 %v220
        %255 = vmatprep.subr.mxu0 0.0
        %256 = vmatpush1.msra.mxu0 %v221
        %257 = vmatprep.subr.mxu0 0.0
        %258 = vmatpush1.msra.mxu0 %v222
        %259 = vmatprep.subr.mxu0 0.0
        %260 = vmatpush1.msra.mxu0 %v223
        %261 = vmatprep.subr.mxu0 0.0
        %262 = vmatpush1.msra.mxu0 %v224
        %263 = vmatprep.subr.mxu0 0.0
        %264 = vmatpush1.msra.mxu0 %v225
        %265 = vmatprep.subr.mxu0 0.0
        %266 = vmatpush1.msra.mxu0 0.0
        %267 = vmatprep.subr.mxu0 0.0
        %268 = vmatpush1.msra.mxu0 0.0
        %269 = vmatprep.subr.mxu0 0.0
        %270 = vmatpush1.msra.mxu0 0.0
        %271 = vmatprep.subr.mxu0 0.0
        %272 = vmatpush1.msra.mxu0 0.0
        %273 = vmatprep.subr.mxu0 0.0
        %274 = vmatpush1.msra.mxu0 0.0
        %275 = vmatprep.subr.mxu0 0.0
        %276 = vmatpush1.msra.mxu0 0.0
        %277 = vmatprep.subr.mxu0 0.0
        %278 = vmatpush1.msra.mxu0 0.0
        %279 = vmatprep.subr.mxu0 0.0
        %280 = vmatpush1.msra.mxu0 0.0
        %281 = vmatprep.subr.mxu0 0.0
        %282 = vmatpush1.msra.mxu0 0.0
        %283 = vmatprep.subr.mxu0 0.0
        %284 = vmatpush1.msra.mxu0 0.0
        %285 = vmatprep.subr.mxu0 0.0
        %286 = vmatpush1.msra.mxu0 0.0
        %287 = vmatprep.subr.mxu0 0.0
        %288 = vmatpush1.msra.mxu0 0.0
        %289 = vmatprep.subr.mxu0 0.0
        %290 = vmatpush1.msra.mxu0 0.0
        %291 = vmatprep.subr.mxu0 0.0
        %292 = vmatpush1.msra.mxu0 0.0
        %293 = vmatprep.subr.mxu0 0.0
        %294 = vmatpush1.msra.mxu0 0.0
        %295 = vmatprep.subr.mxu0 0.0
        %296 = vmatpush1.msra.mxu0 0.0
        %297 = vmatprep.mubr.f32.mxu0 0.0
        %298 = vmatmul.mubr.f32.gmra.mrb[0].mxu0 %v206
        %v299 = vpop.f32.mrb[0].mxu0
        %v300 = vadd.f32 %v231, %v299
        %v301 = vpop.f32.mrb[0].mxu0
        %302 = vmatprep.mubr.f32.mxu0 0.0
        %303 = vmatmul.mubr.f32.gmra.mrb[0].mxu0 %v207
        %v304 = vpop.f32.mrb[0].mxu0
        %v305 = vadd.f32 %v231, %v304
        %v306 = vpop.f32.mrb[0].mxu0
        %307 = vmatprep.mubr.f32.mxu0 0.0
        %308 = vmatmul.mubr.f32.gmra.mrb[0].mxu0 %v208
        %v309 = vpop.f32.mrb[0].mxu0
        %v310 = vadd.f32 %v231, %v309
        %v311 = vpop.f32.mrb[0].mxu0
        %312 = vmatprep.mubr.f32.mxu0 0.0
        %313 = vmatmul.mubr.f32.gmra.mrb[0].mxu0 %v209
        %v314 = vpop.f32.mrb[0].mxu0
        %v315 = vadd.f32 %v231, %v314
        %v316 = vpop.f32.mrb[0].mxu0
        %317 = vdwg.mxu0
        %v318 = vand.u32 2147483647, %v300
        %vm319 = vcmp.le.f32.partialorder %v318, 0.7853982
        %vm320 = vcmp.lt.s32.totalorder %v300, 0
        %v321 = vand.u32 %v300, 2139095040
        %v322 = vshrl.u32 %v321, 23
        %v323 = vsub.s32 %v322, 127
        %v324 = vand.u32 2147483647, %v300
        %v325 = vand.u32 %v324, 8388607
        %v326 = vor.u32 %v325, 8388608
        %v327 = vsub.s32 0, %v326
        %v328 = vadd.s32 %v323, 1
        %vm329 = vcmp.gt.s32.totalorder %v328, 0
        %v330 = vsel %vm329, %v328, 0
        %v331 = vshrl.u32 %v330, 5
        %v332 = vand.u32 %v330, 31
        %v333 = vsub.s32 32, %v332
        %v334 = vshrl.u32 683565275, %v333
        %v335 = vshll.u32 683565275, %v332
        %v336 = vshrl.u32 2475754826, %v333
        %v337 = vor.u32 %v335, %v336
        %v338 = vshll.u32 2475754826, %v332
        %v339 = vshrl.u32 2131351028, %v333
        %v340 = vor.u32 %v338, %v339
        %v341 = vshll.u32 2131351028, %v332
        %v342 = vshrl.u32 2102212464, %v333
        %v343 = vor.u32 %v341, %v342
        %v344 = vshll.u32 2102212464, %v332
        %v345 = vshrl.u32 920167782, %v333
        %v346 = vor.u32 %v344, %v345
        %v347 = vshll.u32 920167782, %v332
        %v348 = vshrl.u32 1326507024, %v333
        %v349 = vor.u32 %v347, %v348
        %vm350 = vcmp.lt.s32.totalorder %v331, 1
        %vm351 = vcmp.lt.s32.totalorder %v331, 2
        %vm352 = vcmp.lt.s32.totalorder %v331, 3
        %vm353 = vcmp.lt.s32.totalorder %v331, 4
        %v354 = vsel %vm350, %v334, %v337
        %v355 = vsel %vm353, %v343, 2102212464
        %v356 = vsel %vm352, %v340, %v355
        %v357 = vsel %vm351, %v354, %v356
        %v358 = vsel %vm350, %v337, %v340
        %v359 = vsel %vm353, %v346, 920167782
        %v360 = vsel %vm352, %v343, %v359
        %v361 = vsel %vm351, %v358, %v360
        %v362 = vsel %vm350, %v340, %v343
        %v363 = vsel %vm353, %v349, 1326507024
        %v364 = vsel %vm352, %v346, %v363
        %v365 = vsel %vm351, %v362, %v364
        %v366 = vshll.u32 %v326, 8
        %v367 = vmul.u32.u64.compose %v366, %v365
        %v368 = vextract.low.u32 %v367
        %v369 = vextract.high.u32 %v367
        %v370 = vmul.u32.u64.compose %v366, %v361
        %v371 = vextract.low.u32 %v370
        %v372 = vextract.high.u32 %v370
        %v373 = vmul.u32 %v366, %v357
        %v374 = vadd.s32 %v369, %v371
        %vm375 = vc.u32 %v369, %v371
        %v376 = vadd.s32 %v372, 1
        %v377 = vsel %vm375, %v376, %v372
        %v378 = vadd.s32 %v373, %v377
        %v379 = vadd.s32 %v378, 536870912
        %v380 = vshrl.u32 %v379, 30
        %v381 = vshll.u32 %v380, 30
        %v382 = vsub.s32 %v378, %v381
        %vm383 = vcmp.lt.s32.totalorder %v382, 0
        %v384 = vsub.s32 0, %v382
        %v385 = vsel %vm383, %v384, %v382
        %v386 = vclz %v385
        %v387 = vsub.s32 %v386, 2
        %vm388 = vcmp.gt.s32.totalorder 0, %v387
        %v389 = vsel %vm388, 0, %v387
        %v390 = vsub.s32 32, %v389
        %v391 = vshll.u32 %v382, %v389
        %v392 = vshrl.u32 %v374, %v390
        %v393 = vor.u32 %v391, %v392
        %v394 = vsub.s32 4294967266, %v389
        %v395 = vadd.s32 %v394, 127
        %v396 = vshll.u32 %v395, 23
        %v397 = vor.u32 4788187, %v396
        %v398 = vand.u32 2147483647, %v397
        %v400 = vcvt.s32.f32 %v393
        %v401 = vmul.f32 %v400, %v398
        %v402 = vxor.u32 %v401, 2147483648
        %v403 = vsel %vm320, %v402, %v401
        %v404 = vsub.s32 4, %v380
        %v405 = vsel %vm320, %v404, %v380
        %v406 = vsel %vm319, %v300, %v403
        %v407 = vsel %vm319, 0, %v405
        %v408 = vcosq.f32.pop %v406
        %v409 = vsinq.f32.pop %v406
        %vm410 = vweird.f32 %v300
        %v411 = vadd.s32 %v407, 3
        %v412 = vand.u32 %v411, 3
        %vm413 = vcmp.lt.s32.totalorder %v412, 2
        %vm414 = vcmp.eq.s32.totalorder %v412, 0
        %v415 = vxor.u32 %v409, 2147483648
        %v416 = vsel %vm414, %v408, %v415
        %vm417 = vcmp.eq.s32.totalorder %v412, 2
        %v418 = vxor.u32 %v408, 2147483648
        %v419 = vsel %vm417, %v418, %v409
        %v420 = vsel %vm413, %v416, %v419
        %v421 = vsel %vm410, nan, %v420
        %v422 = vand.u32 2147483647, %v305
        %vm423 = vcmp.le.f32.partialorder %v422, 0.7853982
        %vm424 = vcmp.lt.s32.totalorder %v305, 0
        %v425 = vand.u32 %v305, 2139095040
        %v426 = vshrl.u32 %v425, 23
        %v427 = vsub.s32 %v426, 127
        %v428 = vand.u32 2147483647, %v305
        %v429 = vand.u32 %v428, 8388607
        %v430 = vor.u32 %v429, 8388608
        %v431 = vsub.s32 0, %v430
        %v432 = vadd.s32 %v427, 1
        %vm433 = vcmp.gt.s32.totalorder %v432, 0
        %v434 = vsel %vm433, %v432, 0
        %v435 = vshrl.u32 %v434, 5
        %v436 = vand.u32 %v434, 31
        %v437 = vsub.s32 32, %v436
        %v438 = vshrl.u32 683565275, %v437
        %v439 = vshll.u32 683565275, %v436
        %v440 = vshrl.u32 2475754826, %v437
        %v441 = vor.u32 %v439, %v440
        %v442 = vshll.u32 2475754826, %v436
        %v443 = vshrl.u32 2131351028, %v437
        %v444 = vor.u32 %v442, %v443
        %v445 = vshll.u32 2131351028, %v436
        %v446 = vshrl.u32 2102212464, %v437
        %v447 = vor.u32 %v445, %v446
        %v448 = vshll.u32 2102212464, %v436
        %v449 = vshrl.u32 920167782, %v437
        %v450 = vor.u32 %v448, %v449
        %v451 = vshll.u32 920167782, %v436
        %v452 = vshrl.u32 1326507024, %v437
        %v453 = vor.u32 %v451, %v452
        %vm454 = vcmp.lt.s32.totalorder %v435, 1
        %vm455 = vcmp.lt.s32.totalorder %v435, 2
        %vm456 = vcmp.lt.s32.totalorder %v435, 3
        %vm457 = vcmp.lt.s32.totalorder %v435, 4
        %v458 = vsel %vm454, %v438, %v441
        %v459 = vsel %vm457, %v447, 2102212464
        %v460 = vsel %vm456, %v444, %v459
        %v461 = vsel %vm455, %v458, %v460
        %v462 = vsel %vm454, %v441, %v444
        %v463 = vsel %vm457, %v450, 920167782
        %v464 = vsel %vm456, %v447, %v463
        %v465 = vsel %vm455, %v462, %v464
        %v466 = vsel %vm454, %v444, %v447
        %v467 = vsel %vm457, %v453, 1326507024
        %v468 = vsel %vm456, %v450, %v467
        %v469 = vsel %vm455, %v466, %v468
        %v470 = vshll.u32 %v430, 8
        %v471 = vmul.u32.u64.compose %v470, %v469
        %v472 = vextract.low.u32 %v471
        %v473 = vextract.high.u32 %v471
        %v474 = vmul.u32.u64.compose %v470, %v465
        %v475 = vextract.low.u32 %v474
        %v476 = vextract.high.u32 %v474
        %v477 = vmul.u32 %v470, %v461
        %v478 = vadd.s32 %v473, %v475
        %vm479 = vc.u32 %v473, %v475
        %v480 = vadd.s32 %v476, 1
        %v481 = vsel %vm479, %v480, %v476
        %v482 = vadd.s32 %v477, %v481
        %v483 = vadd.s32 %v482, 536870912
        %v484 = vshrl.u32 %v483, 30
        %v485 = vshll.u32 %v484, 30
        %v486 = vsub.s32 %v482, %v485
        %vm487 = vcmp.lt.s32.totalorder %v486, 0
        %v488 = vsub.s32 0, %v486
        %v489 = vsel %vm487, %v488, %v486
        %v490 = vclz %v489
        %v491 = vsub.s32 %v490, 2
        %vm492 = vcmp.gt.s32.totalorder 0, %v491
        %v493 = vsel %vm492, 0, %v491
        %v494 = vsub.s32 32, %v493
        %v495 = vshll.u32 %v486, %v493
        %v496 = vshrl.u32 %v478, %v494
        %v497 = vor.u32 %v495, %v496
        %v498 = vsub.s32 4294967266, %v493
        %v499 = vadd.s32 %v498, 127
        %v500 = vshll.u32 %v499, 23
        %v501 = vor.u32 4788187, %v500
        %v502 = vand.u32 2147483647, %v501
        %v504 = vcvt.s32.f32 %v497
        %v505 = vmul.f32 %v504, %v502
        %v506 = vxor.u32 %v505, 2147483648
        %v507 = vsel %vm424, %v506, %v505
        %v508 = vsub.s32 4, %v484
        %v509 = vsel %vm424, %v508, %v484
        %v510 = vsel %vm423, %v305, %v507
        %v511 = vsel %vm423, 0, %v509
        %v512 = vcosq.f32.pop %v510
        %v513 = vsinq.f32.pop %v510
        %vm514 = vweird.f32 %v305
        %v515 = vadd.s32 %v511, 3
        %v516 = vand.u32 %v515, 3
        %vm517 = vcmp.lt.s32.totalorder %v516, 2
        %vm518 = vcmp.eq.s32.totalorder %v516, 0
        %v519 = vxor.u32 %v513, 2147483648
        %v520 = vsel %vm518, %v512, %v519
        %vm521 = vcmp.eq.s32.totalorder %v516, 2
        %v522 = vxor.u32 %v512, 2147483648
        %v523 = vsel %vm521, %v522, %v513
        %v524 = vsel %vm517, %v520, %v523
        %v525 = vsel %vm514, nan, %v524
        %v526 = vand.u32 2147483647, %v310
        %vm527 = vcmp.le.f32.partialorder %v526, 0.7853982
        %vm528 = vcmp.lt.s32.totalorder %v310, 0
        %v529 = vand.u32 %v310, 2139095040
        %v530 = vshrl.u32 %v529, 23
        %v531 = vsub.s32 %v530, 127
        %v532 = vand.u32 2147483647, %v310
        %v533 = vand.u32 %v532, 8388607
        %v534 = vor.u32 %v533, 8388608
        %v535 = vsub.s32 0, %v534
        %v536 = vadd.s32 %v531, 1
        %vm537 = vcmp.gt.s32.totalorder %v536, 0
        %v538 = vsel %vm537, %v536, 0
        %v539 = vshrl.u32 %v538, 5
        %v540 = vand.u32 %v538, 31
        %v541 = vsub.s32 32, %v540
        %v542 = vshrl.u32 683565275, %v541
        %v543 = vshll.u32 683565275, %v540
        %v544 = vshrl.u32 2475754826, %v541
        %v545 = vor.u32 %v543, %v544
        %v546 = vshll.u32 2475754826, %v540
        %v547 = vshrl.u32 2131351028, %v541
        %v548 = vor.u32 %v546, %v547
        %v549 = vshll.u32 2131351028, %v540
        %v550 = vshrl.u32 2102212464, %v541
        %v551 = vor.u32 %v549, %v550
        %v552 = vshll.u32 2102212464, %v540
        %v553 = vshrl.u32 920167782, %v541
        %v554 = vor.u32 %v552, %v553
        %v555 = vshll.u32 920167782, %v540
        %v556 = vshrl.u32 1326507024, %v541
        %v557 = vor.u32 %v555, %v556
        %vm558 = vcmp.lt.s32.totalorder %v539, 1
        %vm559 = vcmp.lt.s32.totalorder %v539, 2
        %vm560 = vcmp.lt.s32.totalorder %v539, 3
        %vm561 = vcmp.lt.s32.totalorder %v539, 4
        %v562 = vsel %vm558, %v542, %v545
        %v563 = vsel %vm561, %v551, 2102212464
        %v564 = vsel %vm560, %v548, %v563
        %v565 = vsel %vm559, %v562, %v564
        %v566 = vsel %vm558, %v545, %v548
        %v567 = vsel %vm561, %v554, 920167782
        %v568 = vsel %vm560, %v551, %v567
        %v569 = vsel %vm559, %v566, %v568
        %v570 = vsel %vm558, %v548, %v551
        %v571 = vsel %vm561, %v557, 1326507024
        %v572 = vsel %vm560, %v554, %v571
        %v573 = vsel %vm559, %v570, %v572
        %v574 = vshll.u32 %v534, 8
        %v575 = vmul.u32.u64.compose %v574, %v573
        %v576 = vextract.low.u32 %v575
        %v577 = vextract.high.u32 %v575
        %v578 = vmul.u32.u64.compose %v574, %v569
        %v579 = vextract.low.u32 %v578
        %v580 = vextract.high.u32 %v578
        %v581 = vmul.u32 %v574, %v565
        %v582 = vadd.s32 %v577, %v579
        %vm583 = vc.u32 %v577, %v579
        %v584 = vadd.s32 %v580, 1
        %v585 = vsel %vm583, %v584, %v580
        %v586 = vadd.s32 %v581, %v585
        %v587 = vadd.s32 %v586, 536870912
        %v588 = vshrl.u32 %v587, 30
        %v589 = vshll.u32 %v588, 30
        %v590 = vsub.s32 %v586, %v589
        %vm591 = vcmp.lt.s32.totalorder %v590, 0
        %v592 = vsub.s32 0, %v590
        %v593 = vsel %vm591, %v592, %v590
        %v594 = vclz %v593
        %v595 = vsub.s32 %v594, 2
        %vm596 = vcmp.gt.s32.totalorder 0, %v595
        %v597 = vsel %vm596, 0, %v595
        %v598 = vsub.s32 32, %v597
        %v599 = vshll.u32 %v590, %v597
        %v600 = vshrl.u32 %v582, %v598
        %v601 = vor.u32 %v599, %v600
        %v602 = vsub.s32 4294967266, %v597
        %v603 = vadd.s32 %v602, 127
        %v604 = vshll.u32 %v603, 23
        %v605 = vor.u32 4788187, %v604
        %v606 = vand.u32 2147483647, %v605
        %v608 = vcvt.s32.f32 %v601
        %v609 = vmul.f32 %v608, %v606
        %v610 = vxor.u32 %v609, 2147483648
        %v611 = vsel %vm528, %v610, %v609
        %v612 = vsub.s32 4, %v588
        %v613 = vsel %vm528, %v612, %v588
        %v614 = vsel %vm527, %v310, %v611
        %v615 = vsel %vm527, 0, %v613
        %v616 = vcosq.f32.pop %v614
        %v617 = vsinq.f32.pop %v614
        %vm618 = vweird.f32 %v310
        %v619 = vadd.s32 %v615, 3
        %v620 = vand.u32 %v619, 3
        %vm621 = vcmp.lt.s32.totalorder %v620, 2
        %vm622 = vcmp.eq.s32.totalorder %v620, 0
        %v623 = vxor.u32 %v617, 2147483648
        %v624 = vsel %vm622, %v616, %v623
        %vm625 = vcmp.eq.s32.totalorder %v620, 2
        %v626 = vxor.u32 %v616, 2147483648
        %v627 = vsel %vm625, %v626, %v617
        %v628 = vsel %vm621, %v624, %v627
        %v629 = vsel %vm618, nan, %v628
        %v630 = vand.u32 2147483647, %v315
        %vm631 = vcmp.le.f32.partialorder %v630, 0.7853982
        %vm632 = vcmp.lt.s32.totalorder %v315, 0
        %v633 = vand.u32 %v315, 2139095040
        %v634 = vshrl.u32 %v633, 23
        %v635 = vsub.s32 %v634, 127
        %v636 = vand.u32 2147483647, %v315
        %v637 = vand.u32 %v636, 8388607
        %v638 = vor.u32 %v637, 8388608
        %v639 = vsub.s32 0, %v638
        %v640 = vadd.s32 %v635, 1
        %vm641 = vcmp.gt.s32.totalorder %v640, 0
        %v642 = vsel %vm641, %v640, 0
        %v643 = vshrl.u32 %v642, 5
        %v644 = vand.u32 %v642, 31
        %v645 = vsub.s32 32, %v644
        %v646 = vshrl.u32 683565275, %v645
        %v647 = vshll.u32 683565275, %v644
        %v648 = vshrl.u32 2475754826, %v645
        %v649 = vor.u32 %v647, %v648
        %v650 = vshll.u32 2475754826, %v644
        %v651 = vshrl.u32 2131351028, %v645
        %v652 = vor.u32 %v650, %v651
        %v653 = vshll.u32 2131351028, %v644
        %v654 = vshrl.u32 2102212464, %v645
        %v655 = vor.u32 %v653, %v654
        %v656 = vshll.u32 2102212464, %v644
        %v657 = vshrl.u32 920167782, %v645
        %v658 = vor.u32 %v656, %v657
        %v659 = vshll.u32 920167782, %v644
        %v660 = vshrl.u32 1326507024, %v645
        %v661 = vor.u32 %v659, %v660
        %vm662 = vcmp.lt.s32.totalorder %v643, 1
        %vm663 = vcmp.lt.s32.totalorder %v643, 2
        %vm664 = vcmp.lt.s32.totalorder %v643, 3
        %vm665 = vcmp.lt.s32.totalorder %v643, 4
        %v666 = vsel %vm662, %v646, %v649
        %v667 = vsel %vm665, %v655, 2102212464
        %v668 = vsel %vm664, %v652, %v667
        %v669 = vsel %vm663, %v666, %v668
        %v670 = vsel %vm662, %v649, %v652
        %v671 = vsel %vm665, %v658, 920167782
        %v672 = vsel %vm664, %v655, %v671
        %v673 = vsel %vm663, %v670, %v672
        %v674 = vsel %vm662, %v652, %v655
        %v675 = vsel %vm665, %v661, 1326507024
        %v676 = vsel %vm664, %v658, %v675
        %v677 = vsel %vm663, %v674, %v676
        %v678 = vshll.u32 %v638, 8
        %v679 = vmul.u32.u64.compose %v678, %v677
        %v680 = vextract.low.u32 %v679
        %v681 = vextract.high.u32 %v679
        %v682 = vmul.u32.u64.compose %v678, %v673
        %v683 = vextract.low.u32 %v682
        %v684 = vextract.high.u32 %v682
        %v685 = vmul.u32 %v678, %v669
        %v686 = vadd.s32 %v681, %v683
        %vm687 = vc.u32 %v681, %v683
        %v688 = vadd.s32 %v684, 1
        %v689 = vsel %vm687, %v688, %v684
        %v690 = vadd.s32 %v685, %v689
        %v691 = vadd.s32 %v690, 536870912
        %v692 = vshrl.u32 %v691, 30
        %v693 = vshll.u32 %v692, 30
        %v694 = vsub.s32 %v690, %v693
        %vm695 = vcmp.lt.s32.totalorder %v694, 0
        %v696 = vsub.s32 0, %v694
        %v697 = vsel %vm695, %v696, %v694
        %v698 = vclz %v697
        %v699 = vsub.s32 %v698, 2
        %vm700 = vcmp.gt.s32.totalorder 0, %v699
        %v701 = vsel %vm700, 0, %v699
        %v702 = vsub.s32 32, %v701
        %v703 = vshll.u32 %v694, %v701
        %v704 = vshrl.u32 %v686, %v702
        %v705 = vor.u32 %v703, %v704
        %v706 = vsub.s32 4294967266, %v701
        %v707 = vadd.s32 %v706, 127
        %v708 = vshll.u32 %v707, 23
        %v709 = vor.u32 4788187, %v708
        %v710 = vand.u32 2147483647, %v709
        %v712 = vcvt.s32.f32 %v705
        %v713 = vmul.f32 %v712, %v710
        %v714 = vxor.u32 %v713, 2147483648
        %v715 = vsel %vm632, %v714, %v713
        %v716 = vsub.s32 4, %v692
        %v717 = vsel %vm632, %v716, %v692
        %v718 = vsel %vm631, %v315, %v715
        %v719 = vsel %vm631, 0, %v717
        %v720 = vcosq.f32.pop %v718
        %v721 = vsinq.f32.pop %v718
        %vm722 = vweird.f32 %v315
        %v723 = vadd.s32 %v719, 3
        %v724 = vand.u32 %v723, 3
        %vm725 = vcmp.lt.s32.totalorder %v724, 2
        %vm726 = vcmp.eq.s32.totalorder %v724, 0
        %v727 = vxor.u32 %v721, 2147483648
        %v728 = vsel %vm726, %v720, %v727
        %vm729 = vcmp.eq.s32.totalorder %v724, 2
        %v730 = vxor.u32 %v720, 2147483648
        %v731 = vsel %vm729, %v730, %v721
        %v732 = vsel %vm725, %v728, %v731
        %v733 = vsel %vm722, nan, %v732
        %734 = vst [vmem:[%s203] sm:$0xff] %v421
        %735 = vst [vmem:[%s203 + $0x8] sm:$0xff] %v525
        %736 = vst [vmem:[%s203 + $0x10] sm:$0xff] %v629
        %737 = vst [vmem:[%s203 + $0x18] sm:$0xff] %v733
        %s738 = sand.u32 %s97, 1
        %s739 = scalar_lea.sflag [#allocation4], %s738
        %s740 = sand.u32 %s97, 1
        %s741 = smul.addr %s740, 32
        %s742 = scalar_lea.vmem [#allocation7], %s741
        // Predicated region
        $region41: #{tpu_custom_call.1} parent=31 // pred_check
          %p743 = pneg %p107
        $region42: #{tpu_custom_call.1} parent=31 // pred_check_branch
          %745 = sbr.rel (%p743) target = $region44
        $region43: #{tpu_custom_call.1} parent=31 // pred_region
          %s746 = smul.u32 4, %s21
          %s748 = ssub.s32 512, 512
          %749 = vsyncadd %s739, %s748
          %s750 = smul.addr %s746, 128
          %s751 = scalar_lea.hbm %s3, %s750
          %s752 = sshll.u32 %s742, 4
          %s753 = int_to_ptr.vmem [resolvable:$true] %s752
          %758 = dma.vmem_to_hbm [thread:$0]  %s753, 512, %s751, %s739, 128, 128, 8
        $region44: #{tpu_custom_call.1} parent=31 // pred_fallthru
          _
      $region32: #{tpu_custom_call.1} parent=5 // pred_fallthru
        _
      %p759 = scmp.le.s32.totalorder 2, %s16
      // Predicated region
      $region45: #{tpu_custom_call.1} parent=5 // pred_check
        %p760 = pneg %p759
      $region46: #{tpu_custom_call.1} parent=5 // pred_check_branch
        %762 = sbr.rel (%p760) target = $region48
      $region47: #{tpu_custom_call.1} parent=5 // pred_region
        %s763 = ssub.s32 %s16, 2
        // Predicated region
        $region49: #{tpu_custom_call.1} parent=47 // pred_check
          %p764 = pneg %p113
        $region50: #{tpu_custom_call.1} parent=47 // pred_check_branch
          %766 = sbr.rel (%p764) target = $region52
        $region51: #{tpu_custom_call.1} parent=47 // pred_region
          %s767 = sand.u32 %s98, 1
          %s768 = scalar_lea.sflag [#allocation4], %s767
          %s769 = sand.u32 %s98, 1
          %s770 = smul.addr %s769, 32
          %s771 = scalar_lea.vmem [#allocation7], %s770
          %772 = dma.done %s768, 512
        $region52: #{tpu_custom_call.1} parent=47 // pred_fallthru
          _
      $region48: #{tpu_custom_call.1} parent=5 // pred_fallthru
        _
    $region6: #{tpu_custom_call.1} parent=1 // loop_footer
      %s20 = sadd.s32 1, %s16
    $region7: #{tpu_custom_call.1} parent=1 // loop_footer_branch
      %15 = sbr.rel target = $region3
    $region8: #{tpu_custom_call.1} parent=1 // loop_exit
      _
    %773 = vsyncpa [#allocation3], 1
    %s774 = scalar_lea.sflag [#allocation3], 1
    %775 = vsyncpa %s774, 1
    %776 = vsyncpa [#allocation6], 1
    %777 = vsyncpa [#allocation4], 1
    %s778 = scalar_lea.sflag [#allocation4], 1
    %779 = vsyncpa %s778, 1

</llo_original>
